<compile_context>
chip_gen: v7x
topology: tpu7x:2x2x1
jax: 0.10.0
libtpu: 0.0.40
codegen_flags: <defaults>
</compile_context>

<pallas_src>
import functools

import jax
import jax.numpy as jnp
import numpy as np
from jax import lax
from jax.experimental import pallas as pl
from jax.experimental.pallas import tpu as pltpu


def _dkm_kernel(x_ref, c_init_ref, c_out_ref, at_out_ref, *,
                inv_temp, threshold, max_iter, eps):
    X = x_ref[...].astype(jnp.float32)                        # (N, D)
    its2 = inv_temp * inv_temp                                # 1/temp^2 (const)
    # ||x||^2 / temp^2 as a lane-dense (1, N) row (broadcasts over K sublanes).
    x_sq_t = (jnp.sum(X * X, axis=1) * its2)[None, :]         # (1, N)

    def scaled_sq_dists(C):
        # d^2 / temp^2, lane-dense (K, N):  x_sq/t^2 + c_sq/t^2 - (2/t^2) C.X^T
        c_sq = jnp.sum(C * C, axis=1, keepdims=True) * its2   # (K, 1)
        Cs = C * (2.0 * its2)                                 # (K, D): folds 2/temp^2
        cx = lax.dot_general(Cs, X, (((1,), (1,)), ((), ())),
                             preferred_element_type=jnp.float32)  # (K, N) = Cs @ X.T
        return jnp.maximum(c_sq + x_sq_t - cx, 0.0)

    def soft_assign(C, *, exact):
        # softmax over K == axis 0 of the (K, N) layout (sublane reduction)
        logits = -jnp.sqrt(scaled_sq_dists(C))                # (K, N) == d / temp
        m = jnp.max(logits, axis=0, keepdims=True)            # (1, N)
        e = jnp.exp(logits - m)                               # (K, N)  EUP
        s = jnp.sum(e, axis=0, keepdims=True)                 # (1, N)
        if exact:
            return e / s                                      # exact normalization
        return e * pl.reciprocal(s, approx=True)              # EUP vrcp, loop body

    def update(C):
        a = soft_assign(C, exact=False)                       # (K, N)
        a_sum = jnp.sum(a, axis=1, keepdims=True) + eps       # (K, 1) lane reduce
        atx = lax.dot_general(a, X, (((1,), (0,)), ((), ())),
                              preferred_element_type=jnp.float32)  # (K, D) = a @ X
        C_new = atx * pl.reciprocal(a_sum, approx=True)       # (K, D)
        diff = jnp.sum(jnp.abs(C_new - C))                    # ||C_new - C||_1
        return C_new, diff

    # Initial unconditional step (mirrors the PyTorch module).
    C0 = c_init_ref[...].astype(jnp.float32)                  # (K, D)
    C_new0, diff0 = update(C0)

    # while diff > threshold and i < max_iter: C = C_new; recompute
    def cond(carry):
        _, _, diff, i = carry
        return jnp.logical_and(diff > threshold, i < max_iter)

    def body(carry):
        _, C_new, _, i = carry
        C_next, diff_next = update(C_new)
        return (C_new, C_next, diff_next, i + 1)

    C_f, _, _, _ = lax.while_loop(cond, body,
                                  (C0, C_new0, diff0, jnp.int32(0)))

    # Returned (C, a): a is the softmax of distances to the *returned* C,
    # exactly normalized (sums over K equal 1), matching the reference.
    a_f = soft_assign(C_f, exact=True)                        # (K, N) lane-dense

    c_out_ref[...] = C_f.astype(c_out_ref.dtype)
    at_out_ref[...] = a_f.astype(at_out_ref.dtype)


def dkm_forward(X, C_init, *, temp=0.5, threshold=1e-4, max_iter=100, eps=1e-6):
    N, D = X.shape
    K, D2 = C_init.shape
    assert D == D2, "X and C_init must share the feature dimension"

    kernel = functools.partial(
        _dkm_kernel,
        inv_temp=float(1.0 / temp),
        threshold=float(threshold),
        max_iter=int(max_iter),
        eps=float(eps),
    )

    # Right-size the VMEM request: I/O arrays plus a handful of (K,N)/(K,D)/(1,N)
    # temporaries with headroom; floor for compiler scratch, cap well below
    # v7x's 64 MiB physical VMEM.
    io_bytes = 4 * (N * D + 2 * K * D + K * N)
    work_bytes = 4 * (4 * K * N + 6 * K * D + 2 * N)
    vmem_limit = int(min(max(2 * (io_bytes + work_bytes) + (2 << 20), 16 << 20),
                         48 << 20))

    vmem = pltpu.MemorySpace.VMEM
    # TODO(synk): for production N where X does not fit in VMEM, stream X in
    # (8,128)-aligned N-tiles (pltpu.emit_pipeline inside the while-loop with
    # atx / a_sum accumulators) and split the N axis across v7x's two
    # TensorCores; at these test sizes the whole problem is VMEM-resident.
    C, a_t = pl.pallas_call(
        kernel,
        out_shape=(jax.ShapeDtypeStruct((K, D), jnp.float32),   # self.C
                   jax.ShapeDtypeStruct((K, N), jnp.float32)),  # self.a, transposed
        in_specs=[pl.BlockSpec(memory_space=vmem),
                  pl.BlockSpec(memory_space=vmem)],
        out_specs=(pl.BlockSpec(memory_space=vmem),
                   pl.BlockSpec(memory_space=vmem)),
        compiler_params=pltpu.CompilerParams(vmem_limit_bytes=vmem_limit),
    )(X, C_init)
    # Kernel computes/stores the assignment matrix lane-dense as (K, N);
    # present it as (N, K) to match the module's output layout.
    return C, a_t.T


def _dkm_reference(X, C_init, temp=0.5, threshold=1e-4, max_iter=100, eps=1e-6):
    """Pure numpy mirror of the PyTorch forward for a sanity check."""
    X = np.asarray(X, np.float32)
    C = np.asarray(C_init, np.float32)

    def step(C):
        d2 = np.maximum((X * X).sum(1)[:, None] + (C * C).sum(1)[None, :]
                        - 2.0 * X @ C.T, 0.0)
        d = -np.sqrt(d2)
        logits = d / temp
        logits = logits - logits.max(1, keepdims=True)
        e = np.exp(logits)
        a = e / e.sum(1, keepdims=True)
        a_sum = a.sum(0) + eps
        C_new = (a.T @ X) / a_sum[:, None]
        diff = np.abs(C_new - C).sum()
        return a, C_new, diff

    a, C_new, diff = step(C)
    i = 0
    while diff > threshold and i < max_iter:
        C = C_new
        a, C_new, diff = step(C)
        i += 1
    return C, a


if __name__ == "__main__":
    key = jax.random.PRNGKey(0)
    kx, kc = jax.random.split(key)
    N, D, K = 64, 32, 8                       # N points, emb dim D, K clusters
    X = jax.random.normal(kx, (N, D), dtype=jnp.float32)
    C_init = jax.random.normal(kc, (K, D), dtype=jnp.float32)

    C, a = dkm_forward(X, C_init)
    jax.block_until_ready((C, a))

    # Light correctness check vs. numpy reference (same algorithm).
    C_ref, a_ref = _dkm_reference(np.asarray(X), np.asarray(C_init))
    np.testing.assert_allclose(np.asarray(C), C_ref, rtol=1e-2, atol=1e-2)
    np.testing.assert_allclose(np.asarray(a), a_ref, rtol=1e-2, atol=1e-2)
    # softmax rows must sum to 1 (final assignments use exact normalization)
    np.testing.assert_allclose(np.asarray(a).sum(1), np.ones(N), rtol=1e-4, atol=1e-4)

    print("KERNEL_OK")
</pallas_src>

<mosaic_0001>
module attributes {stable_mosaic.version = 11 : i64} {
  func.func @_dkm_kernel(%arg0: memref<64x32xf32, #tpu.memory_space<vmem>>, %arg1: memref<8x32xf32, #tpu.memory_space<vmem>>, %arg2: memref<8x32xf32, #tpu.memory_space<vmem>>, %arg3: memref<8x64xf32, #tpu.memory_space<vmem>>) attributes {dimension_semantics = [], scalar_prefetch = 0 : i64, scratch_operands = 0 : i64, tpu.core_type = #tpu.core_type<tc>} {
    %c0 = arith.constant 0 : index
    %c0_0 = arith.constant 0 : index
    %0 = vector.load %arg0[%c0, %c0_0] : memref<64x32xf32, #tpu.memory_space<vmem>>, vector<64x32xf32>
    %1 = arith.mulf %0, %0 : vector<64x32xf32>
    %cst = arith.constant dense<0.000000e+00> : vector<64xf32>
    %2 = vector.multi_reduction <add>, %1, %cst [1] : vector<64x32xf32> to vector<64xf32>
    %cst_1 = arith.constant 4.000000e+00 : f32
    %3 = vector.broadcast %cst_1 : f32 to vector<64xf32>
    %4 = arith.mulf %2, %3 : vector<64xf32>
    %5 = vector.shape_cast %4 : vector<64xf32> to vector<1x64xf32>
    %c0_2 = arith.constant 0 : index
    %c0_3 = arith.constant 0 : index
    %6 = vector.load %arg1[%c0_2, %c0_3] : memref<8x32xf32, #tpu.memory_space<vmem>>, vector<8x32xf32>
    %7 = arith.mulf %6, %6 : vector<8x32xf32>
    %cst_4 = arith.constant dense<0.000000e+00> : vector<8xf32>
    %8 = vector.multi_reduction <add>, %7, %cst_4 [1] : vector<8x32xf32> to vector<8xf32>
    %9 = vector.shape_cast %8 : vector<8xf32> to vector<8x1xf32>
    %cst_5 = arith.constant 4.000000e+00 : f32
    %10 = vector.broadcast %cst_5 : f32 to vector<8x1xf32>
    %11 = arith.mulf %9, %10 : vector<8x1xf32>
    %cst_6 = arith.constant 8.000000e+00 : f32
    %12 = vector.broadcast %cst_6 : f32 to vector<8x32xf32>
    %13 = arith.mulf %6, %12 : vector<8x32xf32>
    %cst_7 = arith.constant dense<0.000000e+00> : vector<8x64xf32>
    %14 = tpu.matmul %13, %0, %cst_7 {dimension_numbers = #tpu.dot_dimension_numbers<[1], [1], [0], [0], [0, 0, 1, 0], [], []>} : vector<8x32xf32>, vector<64x32xf32>, vector<8x64xf32> -> vector<8x64xf32>
    %15 = vector.broadcast %11 : vector<8x1xf32> to vector<8x64xf32>
    %16 = vector.broadcast %5 : vector<1x64xf32> to vector<8x64xf32>
    %17 = arith.addf %15, %16 : vector<8x64xf32>
    %18 = arith.subf %17, %14 : vector<8x64xf32>
    %cst_8 = arith.constant 0.000000e+00 : f32
    %19 = vector.broadcast %cst_8 : f32 to vector<8x64xf32>
    %20 = arith.maximumf %18, %19 : vector<8x64xf32>
    %21 = math.sqrt %20 : vector<8x64xf32>
    %cst_9 = arith.constant 0.000000e+00 : f32
    %22 = vector.broadcast %cst_9 : f32 to vector<8x64xf32>
    %23 = arith.subf %22, %21 : vector<8x64xf32>
    %cst_10 = arith.constant dense<0xFF800000> : vector<64xf32>
    %24 = vector.multi_reduction <maximumf>, %23, %cst_10 [0] : vector<8x64xf32> to vector<64xf32>
    %25 = vector.shape_cast %24 : vector<64xf32> to vector<1x64xf32>
    %26 = vector.broadcast %25 : vector<1x64xf32> to vector<8x64xf32>
    %27 = arith.subf %23, %26 : vector<8x64xf32>
    %28 = math.exp %27 : vector<8x64xf32>
    %cst_11 = arith.constant dense<0.000000e+00> : vector<64xf32>
    %29 = vector.multi_reduction <add>, %28, %cst_11 [0] : vector<8x64xf32> to vector<64xf32>
    %30 = vector.shape_cast %29 : vector<64xf32> to vector<1x64xf32>
    %31 = tpu.reciprocal %30 {approx = true} : vector<1x64xf32> -> vector<1x64xf32>
    %32 = vector.broadcast %31 : vector<1x64xf32> to vector<8x64xf32>
    %33 = arith.mulf %28, %32 : vector<8x64xf32>
    %cst_12 = arith.constant dense<0.000000e+00> : vector<8xf32>
    %34 = vector.multi_reduction <add>, %33, %cst_12 [1] : vector<8x64xf32> to vector<8xf32>
    %35 = vector.shape_cast %34 : vector<8xf32> to vector<8x1xf32>
    %cst_13 = arith.constant 9.99999997E-7 : f32
    %36 = vector.broadcast %cst_13 : f32 to vector<8x1xf32>
    %37 = arith.addf %35, %36 : vector<8x1xf32>
    %cst_14 = arith.constant dense<0.000000e+00> : vector<8x32xf32>
    %38 = tpu.matmul %33, %0, %cst_14 {dimension_numbers = #tpu.dot_dimension_numbers<[1], [0], [0], [1], [0, 0, 1, 1], [], []>} : vector<8x64xf32>, vector<64x32xf32>, vector<8x32xf32> -> vector<8x32xf32>
    %39 = tpu.reciprocal %37 {approx = true} : vector<8x1xf32> -> vector<8x1xf32>
    %40 = vector.broadcast %39 : vector<8x1xf32> to vector<8x32xf32>
    %41 = arith.mulf %38, %40 : vector<8x32xf32>
    %42 = arith.subf %41, %6 : vector<8x32xf32>
    %43 = math.absf %42 : vector<8x32xf32>
    %44 = vector.shape_cast %43 : vector<8x32xf32> to vector<1x8x32xf32>
    %cst_15 = arith.constant dense<0.000000e+00> : vector<1xf32>
    %45 = vector.multi_reduction <add>, %44, %cst_15 [1, 2] : vector<1x8x32xf32> to vector<1xf32>
    %46 = vector.shape_cast %45 : vector<1xf32> to vector<1x1x1xf32>
    %47 = vector.extract %46[0, 0, 0] : f32 from vector<1x1x1xf32>
    %c0_i32 = arith.constant 0 : i32
    %48:4 = scf.while (%arg4 = %6, %arg5 = %41, %arg6 = %47, %arg7 = %c0_i32) : (vector<8x32xf32>, vector<8x32xf32>, f32, i32) -> (vector<8x32xf32>, vector<8x32xf32>, f32, i32) {
      %cst_28 = arith.constant 9.99999974E-5 : f32
      %77 = arith.cmpf ogt, %arg6, %cst_28 : f32
      %c100_i32 = arith.constant 100 : i32
      %78 = arith.cmpi slt, %arg7, %c100_i32 : i32
      %79 = arith.andi %77, %78 : i1
      scf.condition(%79) %arg4, %arg5, %arg6, %arg7 : vector<8x32xf32>, vector<8x32xf32>, f32, i32
    } do {
    ^bb0(%arg4: vector<8x32xf32>, %arg5: vector<8x32xf32>, %arg6: f32, %arg7: i32):
      %77 = arith.mulf %arg5, %arg5 : vector<8x32xf32>
      %cst_28 = arith.constant dense<0.000000e+00> : vector<8xf32>
      %78 = vector.multi_reduction <add>, %77, %cst_28 [1] : vector<8x32xf32> to vector<8xf32>
      %79 = vector.shape_cast %78 : vector<8xf32> to vector<8x1xf32>
      %cst_29 = arith.constant 4.000000e+00 : f32
      %80 = vector.broadcast %cst_29 : f32 to vector<8x1xf32>
      %81 = arith.mulf %79, %80 : vector<8x1xf32>
      %cst_30 = arith.constant 8.000000e+00 : f32
      %82 = vector.broadcast %cst_30 : f32 to vector<8x32xf32>
      %83 = arith.mulf %arg5, %82 : vector<8x32xf32>
      %cst_31 = arith.constant dense<0.000000e+00> : vector<8x64xf32>
      %84 = tpu.matmul %83, %0, %cst_31 {dimension_numbers = #tpu.dot_dimension_numbers<[1], [1], [0], [0], [0, 0, 1, 0], [], []>} : vector<8x32xf32>, vector<64x32xf32>, vector<8x64xf32> -> vector<8x64xf32>
      %85 = vector.broadcast %81 : vector<8x1xf32> to vector<8x64xf32>
      %86 = vector.broadcast %5 : vector<1x64xf32> to vector<8x64xf32>
      %87 = arith.addf %85, %86 : vector<8x64xf32>
      %88 = arith.subf %87, %84 : vector<8x64xf32>
      %cst_32 = arith.constant 0.000000e+00 : f32
      %89 = vector.broadcast %cst_32 : f32 to vector<8x64xf32>
      %90 = arith.maximumf %88, %89 : vector<8x64xf32>
      %91 = math.sqrt %90 : vector<8x64xf32>
      %cst_33 = arith.constant 0.000000e+00 : f32
      %92 = vector.broadcast %cst_33 : f32 to vector<8x64xf32>
      %93 = arith.subf %92, %91 : vector<8x64xf32>
      %cst_34 = arith.constant dense<0xFF800000> : vector<64xf32>
      %94 = vector.multi_reduction <maximumf>, %93, %cst_34 [0] : vector<8x64xf32> to vector<64xf32>
      %95 = vector.shape_cast %94 : vector<64xf32> to vector<1x64xf32>
      %96 = vector.broadcast %95 : vector<1x64xf32> to vector<8x64xf32>
      %97 = arith.subf %93, %96 : vector<8x64xf32>
      %98 = math.exp %97 : vector<8x64xf32>
      %cst_35 = arith.constant dense<0.000000e+00> : vector<64xf32>
      %99 = vector.multi_reduction <add>, %98, %cst_35 [0] : vector<8x64xf32> to vector<64xf32>
      %100 = vector.shape_cast %99 : vector<64xf32> to vector<1x64xf32>
      %101 = tpu.reciprocal %100 {approx = true} : vector<1x64xf32> -> vector<1x64xf32>
      %102 = vector.broadcast %101 : vector<1x64xf32> to vector<8x64xf32>
      %103 = arith.mulf %98, %102 : vector<8x64xf32>
      %cst_36 = arith.constant dense<0.000000e+00> : vector<8xf32>
      %104 = vector.multi_reduction <add>, %103, %cst_36 [1] : vector<8x64xf32> to vector<8xf32>
      %105 = vector.shape_cast %104 : vector<8xf32> to vector<8x1xf32>
      %cst_37 = arith.constant 9.99999997E-7 : f32
      %106 = vector.broadcast %cst_37 : f32 to vector<8x1xf32>
      %107 = arith.addf %105, %106 : vector<8x1xf32>
      %cst_38 = arith.constant dense<0.000000e+00> : vector<8x32xf32>
      %108 = tpu.matmul %103, %0, %cst_38 {dimension_numbers = #tpu.dot_dimension_numbers<[1], [0], [0], [1], [0, 0, 1, 1], [], []>} : vector<8x64xf32>, vector<64x32xf32>, vector<8x32xf32> -> vector<8x32xf32>
      %109 = tpu.reciprocal %107 {approx = true} : vector<8x1xf32> -> vector<8x1xf32>
      %110 = vector.broadcast %109 : vector<8x1xf32> to vector<8x32xf32>
      %111 = arith.mulf %108, %110 : vector<8x32xf32>
      %112 = arith.subf %111, %arg5 : vector<8x32xf32>
      %113 = math.absf %112 : vector<8x32xf32>
      %114 = vector.shape_cast %113 : vector<8x32xf32> to vector<1x8x32xf32>
      %cst_39 = arith.constant dense<0.000000e+00> : vector<1xf32>
      %115 = vector.multi_reduction <add>, %114, %cst_39 [1, 2] : vector<1x8x32xf32> to vector<1xf32>
      %116 = vector.shape_cast %115 : vector<1xf32> to vector<1x1x1xf32>
      %117 = vector.extract %116[0, 0, 0] : f32 from vector<1x1x1xf32>
      %c1_i32 = arith.constant 1 : i32
      %118 = arith.addi %arg7, %c1_i32 : i32
      scf.yield %arg5, %111, %117, %118 : vector<8x32xf32>, vector<8x32xf32>, f32, i32
    }
    %49 = arith.mulf %48#0, %48#0 : vector<8x32xf32>
    %cst_16 = arith.constant dense<0.000000e+00> : vector<8xf32>
    %50 = vector.multi_reduction <add>, %49, %cst_16 [1] : vector<8x32xf32> to vector<8xf32>
    %51 = vector.shape_cast %50 : vector<8xf32> to vector<8x1xf32>
    %cst_17 = arith.constant 4.000000e+00 : f32
    %52 = vector.broadcast %cst_17 : f32 to vector<8x1xf32>
    %53 = arith.mulf %51, %52 : vector<8x1xf32>
    %cst_18 = arith.constant 8.000000e+00 : f32
    %54 = vector.broadcast %cst_18 : f32 to vector<8x32xf32>
    %55 = arith.mulf %48#0, %54 : vector<8x32xf32>
    %cst_19 = arith.constant dense<0.000000e+00> : vector<8x64xf32>
    %56 = tpu.matmul %55, %0, %cst_19 {dimension_numbers = #tpu.dot_dimension_numbers<[1], [1], [0], [0], [0, 0, 1, 0], [], []>} : vector<8x32xf32>, vector<64x32xf32>, vector<8x64xf32> -> vector<8x64xf32>
    %57 = vector.broadcast %53 : vector<8x1xf32> to vector<8x64xf32>
    %58 = vector.broadcast %5 : vector<1x64xf32> to vector<8x64xf32>
    %59 = arith.addf %57, %58 : vector<8x64xf32>
    %60 = arith.subf %59, %56 : vector<8x64xf32>
    %cst_20 = arith.constant 0.000000e+00 : f32
    %61 = vector.broadcast %cst_20 : f32 to vector<8x64xf32>
    %62 = arith.maximumf %60, %61 : vector<8x64xf32>
    %63 = math.sqrt %62 : vector<8x64xf32>
    %cst_21 = arith.constant 0.000000e+00 : f32
    %64 = vector.broadcast %cst_21 : f32 to vector<8x64xf32>
    %65 = arith.subf %64, %63 : vector<8x64xf32>
    %cst_22 = arith.constant dense<0xFF800000> : vector<64xf32>
    %66 = vector.multi_reduction <maximumf>, %65, %cst_22 [0] : vector<8x64xf32> to vector<64xf32>
    %67 = vector.shape_cast %66 : vector<64xf32> to vector<1x64xf32>
    %68 = vector.broadcast %67 : vector<1x64xf32> to vector<8x64xf32>
    %69 = arith.subf %65, %68 : vector<8x64xf32>
    %70 = math.exp %69 : vector<8x64xf32>
    %cst_23 = arith.constant dense<0.000000e+00> : vector<64xf32>
    %71 = vector.multi_reduction <add>, %70, %cst_23 [0] : vector<8x64xf32> to vector<64xf32>
    %72 = vector.shape_cast %71 : vector<64xf32> to vector<1x64xf32>
    %73 = vector.broadcast %72 : vector<1x64xf32> to vector<8x64xf32>
    %74 = arith.divf %70, %73 : vector<8x64xf32>
    %c0_24 = arith.constant 0 : index
    %c0_25 = arith.constant 0 : index
    %75 = vector.load %arg2[%c0_24, %c0_25] : memref<8x32xf32, #tpu.memory_space<vmem>>, vector<8x32xf32>
    tpu.vector_store %arg2[%c0_24, %c0_25], %48#0 {strides = array<i32>} : memref<8x32xf32, #tpu.memory_space<vmem>>, vector<8x32xf32>,
    %c0_26 = arith.constant 0 : index
    %c0_27 = arith.constant 0 : index
    %76 = vector.load %arg3[%c0_26, %c0_27] : memref<8x64xf32, #tpu.memory_space<vmem>>, vector<8x64xf32>
    tpu.vector_store %arg3[%c0_26, %c0_27], %74 {strides = array<i32>} : memref<8x64xf32, #tpu.memory_space<vmem>>, vector<8x64xf32>,
    return
  }
}

</mosaic_0001>

<llo_original>
// kernel: tpu_custom_call.1
$region0: #{tpu_custom_call.1}
  #allocation0 [shape = 'u32[]', space=smem, size = 0x4, offset = 0x4, fixed_abs, tag = 'smem constant byte address 0x4 - core index']
  #allocation1 [shape = 'u32[144,128]{1,0:T(1,128)}', space=vmem, size = 0x12000, scoped, tag = 'internal scratch']
  %s0 = inlined_call_operand.vmem [shape: f32[64,32], index: 0, kind: input, shape index: {}]
  %s1 = inlined_call_operand.vmem [shape: f32[8,32], index: 1, kind: input, shape index: {}]
  %s2 = inlined_call_operand.hbm [shape: f32[8,32], index: 2, kind: output, shape index: {0}]
  %s3 = inlined_call_operand.hbm [shape: f32[8,64], index: 3, kind: output, shape index: {1}]
  %4 = xla_tuple %s2, %s3
  %s5 = sld [smem:[#allocation0]]
  $region33: #{tpu_custom_call.1} parent=0
    _
  %s7 = ssub.s32 1, %s5
  %s8 = scalar_select 0, %s7, %s5
  $region1: #{tpu_custom_call.1} parent=0
    #allocation2 [shape = 'u8[4096]{0}', space=vmem, size = 0x1000, scoped, tag = 'output window, operand 0, single buffered']
    #allocation3 [shape = 's32[1]{0}', space=sflag, size = 0x4, scoped, tag = 'scoped memory for tpu_custom_call.1']
    #allocation4 [shape = 'u8[4096]{0}', space=vmem, size = 0x1000, scoped, tag = 'output window, operand 1, single buffered']
    #allocation5 [shape = 's32[1]{0}', space=sflag, size = 0x4, scoped, tag = 'scoped memory for tpu_custom_call.1']
    %9 = vsyncpa [#allocation3], 0
    %10 = vsyncpa [#allocation5], 0
    // Predicated region
    $region2: #{tpu_custom_call.1} parent=1 // pred_check
      _
    $region3: #{tpu_custom_call.1} parent=1 // pred_check_branch
      %12 = sbr.rel (0) target = $region5
    $region4: #{tpu_custom_call.1} parent=1 // pred_region
      _
    $region5: #{tpu_custom_call.1} parent=1 // pred_fallthru
      _
    // Predicated region
    $region6: #{tpu_custom_call.1} parent=1 // pred_check
      _
    $region7: #{tpu_custom_call.1} parent=1 // pred_check_branch
      %14 = sbr.rel (0) target = $region9
    $region8: #{tpu_custom_call.1} parent=1 // pred_region
      _
    $region9: #{tpu_custom_call.1} parent=1 // pred_fallthru
      _
    %v15 = vld [vmem:[%s0] sm:$0xff]
    %v16 = vld [vmem:[%s0 + $0x8] sm:$0xff]
    %v17 = vld [vmem:[%s0 + $0x10] sm:$0xff]
    %v18 = vld [vmem:[%s0 + $0x18] sm:$0xff]
    %v19 = vld [vmem:[%s0 + $0x20] sm:$0xff]
    %v20 = vld [vmem:[%s0 + $0x28] sm:$0xff]
    %v21 = vld [vmem:[%s0 + $0x30] sm:$0xff]
    %v22 = vld [vmem:[%s0 + $0x38] sm:$0xff]
    %v23 = vmul.f32 %v15, %v15
    %v24 = vmul.f32 %v16, %v16
    %v25 = vmul.f32 %v17, %v17
    %v26 = vmul.f32 %v18, %v18
    %v27 = vmul.f32 %v19, %v19
    %v28 = vmul.f32 %v20, %v20
    %v29 = vmul.f32 %v21, %v21
    %v30 = vmul.f32 %v22, %v22
    %vm31 = vcmask 261120
    %v32 = vsel %vm31, %v23, 0.0
    %33 = vadd.xlane.f32.xlu0 %v32
    %v34 = vpop.xlane.xlu0 %33
    %v35 = vsel %vm31, %v24, 0.0
    %36 = vadd.xlane.f32.xlu0 %v35
    %v37 = vpop.xlane.xlu0 %36
    %v38 = vsel %vm31, %v25, 0.0
    %39 = vadd.xlane.f32.xlu0 %v38
    %v40 = vpop.xlane.xlu0 %39
    %v41 = vsel %vm31, %v26, 0.0
    %42 = vadd.xlane.f32.xlu0 %v41
    %v43 = vpop.xlane.xlu0 %42
    %v44 = vsel %vm31, %v27, 0.0
    %45 = vadd.xlane.f32.xlu0 %v44
    %v46 = vpop.xlane.xlu0 %45
    %v47 = vsel %vm31, %v28, 0.0
    %48 = vadd.xlane.f32.xlu0 %v47
    %v49 = vpop.xlane.xlu0 %48
    %v50 = vsel %vm31, %v29, 0.0
    %51 = vadd.xlane.f32.xlu0 %v50
    %v52 = vpop.xlane.xlu0 %51
    %v53 = vsel %vm31, %v30, 0.0
    %54 = vadd.xlane.f32.xlu0 %v53
    %v55 = vpop.xlane.xlu0 %54
    %v56 = vmul.f32 %v34, 4.0
    %v57 = vmul.f32 %v37, 4.0
    %v58 = vmul.f32 %v40, 4.0
    %v59 = vmul.f32 %v43, 4.0
    %v60 = vmul.f32 %v46, 4.0
    %v61 = vmul.f32 %v49, 4.0
    %v62 = vmul.f32 %v52, 4.0
    %v63 = vmul.f32 %v55, 4.0
    %v64 = vld [vmem:[%s1] sm:$0xff]
    %v65 = vmul.f32 %v64, %v64
    %v66 = vsel %vm31, %v65, 0.0
    %67 = vadd.xlane.f32.xlu0 %v66
    %v68 = vpop.xlane.xlu0 %67
    %v69 = vmul.f32 %v68, 4.0
    %v70 = vmul.f32 %v64, 8.0
    %v72 = vsel %vm31, %v70, 0
    %v75 = vsel %vm31, %v15, 0
    %v78 = vsel %vm31, %v16, 0
    %v81 = vsel %vm31, %v17, 0
    %v84 = vsel %vm31, %v18, 0
    %v87 = vsel %vm31, %v19, 0
    %v90 = vsel %vm31, %v20, 0
    %v93 = vsel %vm31, %v21, 0
    %v96 = vsel %vm31, %v22, 0
    %98 = vmatprep.subr.mxu0 0.0
    %99 = vmatpush1.xpose.msra.mxu0 %v75
    %100 = vmatprep.subr.mxu0 0.0
    %101 = vmatpush1.xpose.msra.mxu0 %v78
    %102 = vmatprep.subr.mxu0 0.0
    %103 = vmatpush1.xpose.msra.mxu0 %v81
    %104 = vmatprep.subr.mxu0 0.0
    %105 = vmatpush1.xpose.msra.mxu0 %v84
    %106 = vmatprep.subr.mxu0 0.0
    %107 = vmatpush1.xpose.msra.mxu0 %v87
    %108 = vmatprep.subr.mxu0 0.0
    %109 = vmatpush1.xpose.msra.mxu0 %v90
    %110 = vmatprep.subr.mxu0 0.0
    %111 = vmatpush1.xpose.msra.mxu0 %v93
    %112 = vmatprep.subr.mxu0 0.0
    %113 = vmatpush1.xpose.msra.mxu0 %v96
    %114 = vmatprep.subr.mxu0 0.0
    %115 = vmatpush1.xpose.msra.mxu0 0.0
    %116 = vmatprep.subr.mxu0 0.0
    %117 = vmatpush1.xpose.msra.mxu0 0.0
    %118 = vmatprep.subr.mxu0 0.0
    %119 = vmatpush1.xpose.msra.mxu0 0.0
    %120 = vmatprep.subr.mxu0 0.0
    %121 = vmatpush1.xpose.msra.mxu0 0.0
    %122 = vmatprep.subr.mxu0 0.0
    %123 = vmatpush1.xpose.msra.mxu0 0.0
    %124 = vmatprep.subr.mxu0 0.0
    %125 = vmatpush1.xpose.msra.mxu0 0.0
    %126 = vmatprep.subr.mxu0 0.0
    %127 = vmatpush1.xpose.msra.mxu0 0.0
    %128 = vmatprep.subr.mxu0 0.0
    %129 = vmatpush1.xpose.msra.mxu0 0.0
    %130 = vmatprep.subr.mxu0 0.0
    %131 = vmatpush1.xpose.msra.mxu0 0.0
    %132 = vmatprep.subr.mxu0 0.0
    %133 = vmatpush1.xpose.msra.mxu0 0.0
    %134 = vmatprep.subr.mxu0 0.0
    %135 = vmatpush1.xpose.msra.mxu0 0.0
    %136 = vmatprep.subr.mxu0 0.0
    %137 = vmatpush1.xpose.msra.mxu0 0.0
    %138 = vmatprep.subr.mxu0 0.0
    %139 = vmatpush1.xpose.msra.mxu0 0.0
    %140 = vmatprep.subr.mxu0 0.0
    %141 = vmatpush1.xpose.msra.mxu0 0.0
    %142 = vmatprep.subr.mxu0 0.0
    %143 = vmatpush1.xpose.msra.mxu0 0.0
    %144 = vmatprep.subr.mxu0 0.0
    %145 = vmatpush1.xpose.msra.mxu0 0.0
    %146 = vmatprep.subr.mxu0 0.0
    %147 = vmatpush1.xpose.msra.mxu0 0.0
    %148 = vmatprep.subr.mxu0 0.0
    %149 = vmatpush1.xpose.msra.mxu0 0.0
    %150 = vmatprep.subr.mxu0 0.0
    %151 = vmatpush1.xpose.msra.mxu0 0.0
    %152 = vmatprep.subr.mxu0 0.0
    %153 = vmatpush1.xpose.msra.mxu0 0.0
    %154 = vmatprep.subr.mxu0 0.0
    %155 = vmatpush1.xpose.msra.mxu0 0.0
    %156 = vmatprep.subr.mxu0 0.0
    %157 = vmatpush1.xpose.msra.mxu0 0.0
    %158 = vmatprep.subr.mxu0 0.0
    %159 = vmatpush1.xpose.msra.mxu0 0.0
    %160 = vmatprep.subr.mxu0 0.0
    %161 = vmatpush1.xpose.msra.mxu0 0.0
    %162 = vmatprep.mubr.f32.mxu0 0.0
    %163 = vmatmul.mubr.f32.gmra.mrb[0].mxu0 %v72
    %v164 = vpop.f32.mrb[0].mxu0
    %v165 = vadd.f32 0.0, %v164
    %v166 = vpop.f32.mrb[0].mxu0
    %167 = vdwg.mxu0
    %v176 = vlaneseq
    %v177 = vand.u32 %v176, 127
    %v178 = vlaneseq
    %v179 = vshrl.u32 %v178, 7
    %v180 = vsub.s32 %v177, %v179
    %v181 = vrot.slane %v56, %v180
    %v182 = vadd.s32 %v177, 4294967288
    %v183 = vlaneseq
    %v184 = vshrl.u32 %v183, 7
    %v185 = vsub.s32 %v182, %v184
    %v186 = vrot.slane %v57, %v185
    %vm187 = vcmask 130112
    %v188 = vsel %vm187, %v186, %v181
    %v189 = vadd.s32 %v177, 4294967280
    %v190 = vlaneseq
    %v191 = vshrl.u32 %v190, 7
    %v192 = vsub.s32 %v189, %v191
    %v193 = vrot.slane %v58, %v192
    %vm194 = vcmask 195712
    %v195 = vsel %vm194, %v193, %v188
    %v196 = vadd.s32 %v177, 4294967272
    %v197 = vlaneseq
    %v198 = vshrl.u32 %v197, 7
    %v199 = vsub.s32 %v196, %v198
    %v200 = vrot.slane %v59, %v199
    %vm201 = vcmask 261312
    %v202 = vsel %vm201, %v200, %v195
    %v203 = vadd.s32 %v177, 4294967264
    %v204 = vlaneseq
    %v205 = vshrl.u32 %v204, 7
    %v206 = vsub.s32 %v203, %v205
    %v207 = vrot.slane %v60, %v206
    %vm208 = vcmask 326912
    %v209 = vsel %vm208, %v207, %v202
    %v210 = vadd.s32 %v177, 4294967256
    %v211 = vlaneseq
    %v212 = vshrl.u32 %v211, 7
    %v213 = vsub.s32 %v210, %v212
    %v214 = vrot.slane %v61, %v213
    %vm215 = vcmask 392512
    %v216 = vsel %vm215, %v214, %v209
    %v217 = vadd.s32 %v177, 4294967248
    %v218 = vlaneseq
    %v219 = vshrl.u32 %v218, 7
    %v220 = vsub.s32 %v217, %v219
    %v221 = vrot.slane %v62, %v220
    %vm222 = vcmask 458112
    %v223 = vsel %vm222, %v221, %v216
    %v224 = vadd.s32 %v177, 4294967240
    %v225 = vlaneseq
    %v226 = vshrl.u32 %v225, 7
    %v227 = vsub.s32 %v224, %v226
    %v228 = vrot.slane %v63, %v227
    %vm229 = vcmask 523712
    %v230 = vsel %vm229, %v228, %v223
    %vm231 = vcmask 1042434
    %v232 = vsel %vm231, %v230, %v230
    %vm233 = vcmask 1043459
    %v234 = vsel %vm233, %v230, %v232
    %vm235 = vcmask 1044484
    %v236 = vsel %vm235, %v230, %v234
    %vm237 = vcmask 1045509
    %v238 = vsel %vm237, %v230, %v236
    %vm239 = vcmask 1046534
    %v240 = vsel %vm239, %v230, %v238
    %vm241 = vcmask 1047559
    %v242 = vsel %vm241, %v230, %v240
    %v244 = vadd.f32 %v69, %v242
    %v245 = vsub.f32 %v244, %v165
    %v246 = vmax.f32 %v245, 0.0
    %v247 = vrsqrt.pop %v246
    %v248 = vmul.f32 %v246, %v247
    %vm249 = vcmp.eq.f32.partialorder %v246, inf
    %v250 = vsel %vm249, %v246, %v248
    %vm251 = vcmp.eq.f32.partialorder %v246, 0.0
    %v252 = vand.u32 %v246, 2147483648
    %v253 = vsel %vm251, %v252, %v250
    %v254 = vsub.f32 0.0, %v253
    %vm255 = vcmask 523264
    %v256 = vsel %vm255, %v254, -inf
    %v257 = vrot.slane %v256, 4
    %v258 = vmax.f32 %v256, %v257
    %v259 = vrot.slane %v258, 2
    %v260 = vmax.f32 %v258, %v259
    %v261 = vrot.slane %v260, 1
    %v262 = vmax.f32 %v260, %v261
    %v263 = vsub.f32 %v254, %v262
    %v264 = vmul.f32 %v263, 1.442695
    %v265 = vpow.pop %v264
    %v266 = vsel %vm255, %v265, 0.0
    %v267 = vrot.slane %v266, 4
    %v268 = vadd.f32 %v266, %v267
    %v269 = vrot.slane %v268, 2
    %v270 = vadd.f32 %v268, %v269
    %v271 = vrot.slane %v270, 1
    %v272 = vadd.f32 %v270, %v271
    %v273 = vrcp.pop %v272
    %v274 = vmul.f32 %v265, %v273
    %v275 = vsel %vm255, %v274, 0.0
    %276 = vadd.xlane.f32.xlu0 %v275
    %v277 = vpop.xlane.xlu0 %276
    %v278 = vadd.f32 %v277, 1e-06
    %v280 = vsel %vm255, %v274, 0
    %282 = vmatprep.subr.mxu0 0.0
    %283 = vmatpush1.msra.mxu0 %v15
    %284 = vmatprep.subr.mxu0 0.0
    %285 = vmatpush1.msra.mxu0 %v16
    %286 = vmatprep.subr.mxu0 0.0
    %287 = vmatpush1.msra.mxu0 %v17
    %288 = vmatprep.subr.mxu0 0.0
    %289 = vmatpush1.msra.mxu0 %v18
    %290 = vmatprep.subr.mxu0 0.0
    %291 = vmatpush1.msra.mxu0 %v19
    %292 = vmatprep.subr.mxu0 0.0
    %293 = vmatpush1.msra.mxu0 %v20
    %294 = vmatprep.subr.mxu0 0.0
    %295 = vmatpush1.msra.mxu0 %v21
    %296 = vmatprep.subr.mxu0 0.0
    %297 = vmatpush1.msra.mxu0 %v22
    %298 = vmatprep.subr.mxu0 0.0
    %299 = vmatpush1.msra.mxu0 0.0
    %300 = vmatprep.subr.mxu0 0.0
    %301 = vmatpush1.msra.mxu0 0.0
    %302 = vmatprep.subr.mxu0 0.0
    %303 = vmatpush1.msra.mxu0 0.0
    %304 = vmatprep.subr.mxu0 0.0
    %305 = vmatpush1.msra.mxu0 0.0
    %306 = vmatprep.subr.mxu0 0.0
    %307 = vmatpush1.msra.mxu0 0.0
    %308 = vmatprep.subr.mxu0 0.0
    %309 = vmatpush1.msra.mxu0 0.0
    %310 = vmatprep.subr.mxu0 0.0
    %311 = vmatpush1.msra.mxu0 0.0
    %312 = vmatprep.subr.mxu0 0.0
    %313 = vmatpush1.msra.mxu0 0.0
    %314 = vmatprep.subr.mxu0 0.0
    %315 = vmatpush1.msra.mxu0 0.0
    %316 = vmatprep.subr.mxu0 0.0
    %317 = vmatpush1.msra.mxu0 0.0
    %318 = vmatprep.subr.mxu0 0.0
    %319 = vmatpush1.msra.mxu0 0.0
    %320 = vmatprep.subr.mxu0 0.0
    %321 = vmatpush1.msra.mxu0 0.0
    %322 = vmatprep.subr.mxu0 0.0
    %323 = vmatpush1.msra.mxu0 0.0
    %324 = vmatprep.subr.mxu0 0.0
    %325 = vmatpush1.msra.mxu0 0.0
    %326 = vmatprep.subr.mxu0 0.0
    %327 = vmatpush1.msra.mxu0 0.0
    %328 = vmatprep.subr.mxu0 0.0
    %329 = vmatpush1.msra.mxu0 0.0
    %330 = vmatprep.subr.mxu0 0.0
    %331 = vmatpush1.msra.mxu0 0.0
    %332 = vmatprep.subr.mxu0 0.0
    %333 = vmatpush1.msra.mxu0 0.0
    %334 = vmatprep.subr.mxu0 0.0
    %335 = vmatpush1.msra.mxu0 0.0
    %336 = vmatprep.subr.mxu0 0.0
    %337 = vmatpush1.msra.mxu0 0.0
    %338 = vmatprep.subr.mxu0 0.0
    %339 = vmatpush1.msra.mxu0 0.0
    %340 = vmatprep.subr.mxu0 0.0
    %341 = vmatpush1.msra.mxu0 0.0
    %342 = vmatprep.subr.mxu0 0.0
    %343 = vmatpush1.msra.mxu0 0.0
    %344 = vmatprep.subr.mxu0 0.0
    %345 = vmatpush1.msra.mxu0 0.0
    %346 = vmatprep.mubr.f32.mxu0 0.0
    %347 = vmatmul.mubr.f32.gmra.mrb[0].mxu0 %v280
    %v348 = vpop.f32.mrb[0].mxu0
    %v349 = vadd.f32 0.0, %v348
    %v350 = vpop.f32.mrb[0].mxu0
    %351 = vdwg.mxu0
    %v352 = vrcp.pop %v278
    %v353 = vmul.f32 %v349, %v352
    %v354 = vsub.f32 %v353, %v64
    %v355 = vand.u32 2147483647, %v354
    %v356 = vsel %vm31, %v355, 0.0
    %357 = vadd.xlane.f32.xlu0 %v356
    %v358 = vpop.xlane.xlu0 %357
    %v359 = vrot.slane %v358, 4
    %v360 = vadd.f32 %v358, %v359
    %v361 = vrot.slane %v360, 2
    %v362 = vadd.f32 %v360, %v361
    %v363 = vrot.slane %v362, 1
    %v364 = vadd.f32 %v362, %v363
    %s365 = vtos %v364
    // While loop
    $region10: #{tpu_custom_call.1} parent=1 // loop_pre_header
      _
    $region11: #{tpu_custom_call.1} parent=1 // loop_header
      %v367 = vphi %v64, %v368
      %v368 = vphi %v353, %v564
      %s369 = sphi %s365, %s576
      %s370 = sphi 0, %s577
      %p371 = scmp.gt.f32.partialorder %s369, 0.0001
      %p372 = scmp.lt.s32.totalorder %s370, 100
      %p373 = pnand %p371, %p372
      %p374 = pneg %p373
    $region12: #{tpu_custom_call.1} parent=1 // loop_header_branch
      %376 = sbr.rel (%p373) target = $region16
    $region13: #{tpu_custom_call.1} parent=1 // loop_body
      %v377 = vmul.f32 %v368, %v368
      %v378 = vsel %vm31, %v377, 0.0
      %379 = vadd.xlane.f32.xlu0 %v378
      %v380 = vpop.xlane.xlu0 %379
      %v381 = vmul.f32 %v380, 4.0
      %v382 = vmul.f32 %v368, 8.0
      %v384 = vsel %vm31, %v382, 0
      %386 = vmatprep.subr.mxu0 0.0
      %387 = vmatpush1.xpose.msra.mxu0 %v75
      %388 = vmatprep.subr.mxu0 0.0
      %389 = vmatpush1.xpose.msra.mxu0 %v78
      %390 = vmatprep.subr.mxu0 0.0
      %391 = vmatpush1.xpose.msra.mxu0 %v81
      %392 = vmatprep.subr.mxu0 0.0
      %393 = vmatpush1.xpose.msra.mxu0 %v84
      %394 = vmatprep.subr.mxu0 0.0
      %395 = vmatpush1.xpose.msra.mxu0 %v87
      %396 = vmatprep.subr.mxu0 0.0
      %397 = vmatpush1.xpose.msra.mxu0 %v90
      %398 = vmatprep.subr.mxu0 0.0
      %399 = vmatpush1.xpose.msra.mxu0 %v93
      %400 = vmatprep.subr.mxu0 0.0
      %401 = vmatpush1.xpose.msra.mxu0 %v96
      %402 = vmatprep.subr.mxu0 0.0
      %403 = vmatpush1.xpose.msra.mxu0 0.0
      %404 = vmatprep.subr.mxu0 0.0
      %405 = vmatpush1.xpose.msra.mxu0 0.0
      %406 = vmatprep.subr.mxu0 0.0
      %407 = vmatpush1.xpose.msra.mxu0 0.0
      %408 = vmatprep.subr.mxu0 0.0
      %409 = vmatpush1.xpose.msra.mxu0 0.0
      %410 = vmatprep.subr.mxu0 0.0
      %411 = vmatpush1.xpose.msra.mxu0 0.0
      %412 = vmatprep.subr.mxu0 0.0
      %413 = vmatpush1.xpose.msra.mxu0 0.0
      %414 = vmatprep.subr.mxu0 0.0
      %415 = vmatpush1.xpose.msra.mxu0 0.0
      %416 = vmatprep.subr.mxu0 0.0
      %417 = vmatpush1.xpose.msra.mxu0 0.0
      %418 = vmatprep.subr.mxu0 0.0
      %419 = vmatpush1.xpose.msra.mxu0 0.0
      %420 = vmatprep.subr.mxu0 0.0
      %421 = vmatpush1.xpose.msra.mxu0 0.0
      %422 = vmatprep.subr.mxu0 0.0
      %423 = vmatpush1.xpose.msra.mxu0 0.0
      %424 = vmatprep.subr.mxu0 0.0
      %425 = vmatpush1.xpose.msra.mxu0 0.0
      %426 = vmatprep.subr.mxu0 0.0
      %427 = vmatpush1.xpose.msra.mxu0 0.0
      %428 = vmatprep.subr.mxu0 0.0
      %429 = vmatpush1.xpose.msra.mxu0 0.0
      %430 = vmatprep.subr.mxu0 0.0
      %431 = vmatpush1.xpose.msra.mxu0 0.0
      %432 = vmatprep.subr.mxu0 0.0
      %433 = vmatpush1.xpose.msra.mxu0 0.0
      %434 = vmatprep.subr.mxu0 0.0
      %435 = vmatpush1.xpose.msra.mxu0 0.0
      %436 = vmatprep.subr.mxu0 0.0
      %437 = vmatpush1.xpose.msra.mxu0 0.0
      %438 = vmatprep.subr.mxu0 0.0
      %439 = vmatpush1.xpose.msra.mxu0 0.0
      %440 = vmatprep.subr.mxu0 0.0
      %441 = vmatpush1.xpose.msra.mxu0 0.0
      %442 = vmatprep.subr.mxu0 0.0
      %443 = vmatpush1.xpose.msra.mxu0 0.0
      %444 = vmatprep.subr.mxu0 0.0
      %445 = vmatpush1.xpose.msra.mxu0 0.0
      %446 = vmatprep.subr.mxu0 0.0
      %447 = vmatpush1.xpose.msra.mxu0 0.0
      %448 = vmatprep.subr.mxu0 0.0
      %449 = vmatpush1.xpose.msra.mxu0 0.0
      %450 = vmatprep.mubr.f32.mxu0 0.0
      %451 = vmatmul.mubr.f32.gmra.mrb[0].mxu0 %v384
      %v452 = vpop.f32.mrb[0].mxu0
      %v453 = vadd.f32 0.0, %v452
      %v454 = vpop.f32.mrb[0].mxu0
      %455 = vdwg.mxu0
      %v456 = vadd.f32 %v381, %v242
      %v457 = vsub.f32 %v456, %v453
      %v458 = vmax.f32 %v457, 0.0
      %v459 = vrsqrt.pop %v458
      %v460 = vmul.f32 %v458, %v459
      %vm461 = vcmp.eq.f32.partialorder %v458, inf
      %v462 = vsel %vm461, %v458, %v460
      %vm463 = vcmp.eq.f32.partialorder %v458, 0.0
      %v464 = vand.u32 %v458, 2147483648
      %v465 = vsel %vm463, %v464, %v462
      %v466 = vsub.f32 0.0, %v465
      %v467 = vsel %vm255, %v466, -inf
      %v468 = vrot.slane %v467, 4
      %v469 = vmax.f32 %v467, %v468
      %v470 = vrot.slane %v469, 2
      %v471 = vmax.f32 %v469, %v470
      %v472 = vrot.slane %v471, 1
      %v473 = vmax.f32 %v471, %v472
      %v474 = vsub.f32 %v466, %v473
      %v475 = vmul.f32 %v474, 1.442695
      %v476 = vpow.pop %v475
      %v477 = vsel %vm255, %v476, 0.0
      %v478 = vrot.slane %v477, 4
      %v479 = vadd.f32 %v477, %v478
      %v480 = vrot.slane %v479, 2
      %v481 = vadd.f32 %v479, %v480
      %v482 = vrot.slane %v481, 1
      %v483 = vadd.f32 %v481, %v482
      %v484 = vrcp.pop %v483
      %v485 = vmul.f32 %v476, %v484
      %v486 = vsel %vm255, %v485, 0.0
      %487 = vadd.xlane.f32.xlu0 %v486
      %v488 = vpop.xlane.xlu0 %487
      %v489 = vadd.f32 %v488, 1e-06
      %v491 = vsel %vm255, %v485, 0
      %493 = vmatprep.subr.mxu0 0.0
      %494 = vmatpush1.msra.mxu0 %v15
      %495 = vmatprep.subr.mxu0 0.0
      %496 = vmatpush1.msra.mxu0 %v16
      %497 = vmatprep.subr.mxu0 0.0
      %498 = vmatpush1.msra.mxu0 %v17
      %499 = vmatprep.subr.mxu0 0.0
      %500 = vmatpush1.msra.mxu0 %v18
      %501 = vmatprep.subr.mxu0 0.0
      %502 = vmatpush1.msra.mxu0 %v19
      %503 = vmatprep.subr.mxu0 0.0
      %504 = vmatpush1.msra.mxu0 %v20
      %505 = vmatprep.subr.mxu0 0.0
      %506 = vmatpush1.msra.mxu0 %v21
      %507 = vmatprep.subr.mxu0 0.0
      %508 = vmatpush1.msra.mxu0 %v22
      %509 = vmatprep.subr.mxu0 0.0
      %510 = vmatpush1.msra.mxu0 0.0
      %511 = vmatprep.subr.mxu0 0.0
      %512 = vmatpush1.msra.mxu0 0.0
      %513 = vmatprep.subr.mxu0 0.0
      %514 = vmatpush1.msra.mxu0 0.0
      %515 = vmatprep.subr.mxu0 0.0
      %516 = vmatpush1.msra.mxu0 0.0
      %517 = vmatprep.subr.mxu0 0.0
      %518 = vmatpush1.msra.mxu0 0.0
      %519 = vmatprep.subr.mxu0 0.0
      %520 = vmatpush1.msra.mxu0 0.0
      %521 = vmatprep.subr.mxu0 0.0
      %522 = vmatpush1.msra.mxu0 0.0
      %523 = vmatprep.subr.mxu0 0.0
      %524 = vmatpush1.msra.mxu0 0.0
      %525 = vmatprep.subr.mxu0 0.0
      %526 = vmatpush1.msra.mxu0 0.0
      %527 = vmatprep.subr.mxu0 0.0
      %528 = vmatpush1.msra.mxu0 0.0
      %529 = vmatprep.subr.mxu0 0.0
      %530 = vmatpush1.msra.mxu0 0.0
      %531 = vmatprep.subr.mxu0 0.0
      %532 = vmatpush1.msra.mxu0 0.0
      %533 = vmatprep.subr.mxu0 0.0
      %534 = vmatpush1.msra.mxu0 0.0
      %535 = vmatprep.subr.mxu0 0.0
      %536 = vmatpush1.msra.mxu0 0.0
      %537 = vmatprep.subr.mxu0 0.0
      %538 = vmatpush1.msra.mxu0 0.0
      %539 = vmatprep.subr.mxu0 0.0
      %540 = vmatpush1.msra.mxu0 0.0
      %541 = vmatprep.subr.mxu0 0.0
      %542 = vmatpush1.msra.mxu0 0.0
      %543 = vmatprep.subr.mxu0 0.0
      %544 = vmatpush1.msra.mxu0 0.0
      %545 = vmatprep.subr.mxu0 0.0
      %546 = vmatpush1.msra.mxu0 0.0
      %547 = vmatprep.subr.mxu0 0.0
      %548 = vmatpush1.msra.mxu0 0.0
      %549 = vmatprep.subr.mxu0 0.0
      %550 = vmatpush1.msra.mxu0 0.0
      %551 = vmatprep.subr.mxu0 0.0
      %552 = vmatpush1.msra.mxu0 0.0
      %553 = vmatprep.subr.mxu0 0.0
      %554 = vmatpush1.msra.mxu0 0.0
      %555 = vmatprep.subr.mxu0 0.0
      %556 = vmatpush1.msra.mxu0 0.0
      %557 = vmatprep.mubr.f32.mxu0 0.0
      %558 = vmatmul.mubr.f32.gmra.mrb[0].mxu0 %v491
      %v559 = vpop.f32.mrb[0].mxu0
      %v560 = vadd.f32 0.0, %v559
      %v561 = vpop.f32.mrb[0].mxu0
      %562 = vdwg.mxu0
      %v563 = vrcp.pop %v489
      %v564 = vmul.f32 %v560, %v563
      %v565 = vsub.f32 %v564, %v368
      %v566 = vand.u32 2147483647, %v565
      %v567 = vsel %vm31, %v566, 0.0
      %568 = vadd.xlane.f32.xlu0 %v567
      %v569 = vpop.xlane.xlu0 %568
      %v570 = vrot.slane %v569, 4
      %v571 = vadd.f32 %v569, %v570
      %v572 = vrot.slane %v571, 2
      %v573 = vadd.f32 %v571, %v572
      %v574 = vrot.slane %v573, 1
      %v575 = vadd.f32 %v573, %v574
      %s576 = vtos %v575
      %s577 = sadd.s32 %s370, 1
    $region14: #{tpu_custom_call.1} parent=1 // loop_footer
      _
    $region15: #{tpu_custom_call.1} parent=1 // loop_footer_branch
      %366 = sbr.rel target = $region11
    $region16: #{tpu_custom_call.1} parent=1 // loop_exit
      _
    %v578 = vmul.f32 %v367, %v367
    %v579 = vsel %vm31, %v578, 0.0
    %580 = vadd.xlane.f32.xlu0 %v579
    %v581 = vpop.xlane.xlu0 %580
    %v582 = vmul.f32 %v581, 4.0
    %v583 = vmul.f32 %v367, 8.0
    %v585 = vsel %vm31, %v583, 0
    %587 = vmatprep.subr.mxu0 0.0
    %588 = vmatpush1.xpose.msra.mxu0 %v75
    %589 = vmatprep.subr.mxu0 0.0
    %590 = vmatpush1.xpose.msra.mxu0 %v78
    %591 = vmatprep.subr.mxu0 0.0
    %592 = vmatpush1.xpose.msra.mxu0 %v81
    %593 = vmatprep.subr.mxu0 0.0
    %594 = vmatpush1.xpose.msra.mxu0 %v84
    %595 = vmatprep.subr.mxu0 0.0
    %596 = vmatpush1.xpose.msra.mxu0 %v87
    %597 = vmatprep.subr.mxu0 0.0
    %598 = vmatpush1.xpose.msra.mxu0 %v90
    %599 = vmatprep.subr.mxu0 0.0
    %600 = vmatpush1.xpose.msra.mxu0 %v93
    %601 = vmatprep.subr.mxu0 0.0
    %602 = vmatpush1.xpose.msra.mxu0 %v96
    %603 = vmatprep.subr.mxu0 0.0
    %604 = vmatpush1.xpose.msra.mxu0 0.0
    %605 = vmatprep.subr.mxu0 0.0
    %606 = vmatpush1.xpose.msra.mxu0 0.0
    %607 = vmatprep.subr.mxu0 0.0
    %608 = vmatpush1.xpose.msra.mxu0 0.0
    %609 = vmatprep.subr.mxu0 0.0
    %610 = vmatpush1.xpose.msra.mxu0 0.0
    %611 = vmatprep.subr.mxu0 0.0
    %612 = vmatpush1.xpose.msra.mxu0 0.0
    %613 = vmatprep.subr.mxu0 0.0
    %614 = vmatpush1.xpose.msra.mxu0 0.0
    %615 = vmatprep.subr.mxu0 0.0
    %616 = vmatpush1.xpose.msra.mxu0 0.0
    %617 = vmatprep.subr.mxu0 0.0
    %618 = vmatpush1.xpose.msra.mxu0 0.0
    %619 = vmatprep.subr.mxu0 0.0
    %620 = vmatpush1.xpose.msra.mxu0 0.0
    %621 = vmatprep.subr.mxu0 0.0
    %622 = vmatpush1.xpose.msra.mxu0 0.0
    %623 = vmatprep.subr.mxu0 0.0
    %624 = vmatpush1.xpose.msra.mxu0 0.0
    %625 = vmatprep.subr.mxu0 0.0
    %626 = vmatpush1.xpose.msra.mxu0 0.0
    %627 = vmatprep.subr.mxu0 0.0
    %628 = vmatpush1.xpose.msra.mxu0 0.0
    %629 = vmatprep.subr.mxu0 0.0
    %630 = vmatpush1.xpose.msra.mxu0 0.0
    %631 = vmatprep.subr.mxu0 0.0
    %632 = vmatpush1.xpose.msra.mxu0 0.0
    %633 = vmatprep.subr.mxu0 0.0
    %634 = vmatpush1.xpose.msra.mxu0 0.0
    %635 = vmatprep.subr.mxu0 0.0
    %636 = vmatpush1.xpose.msra.mxu0 0.0
    %637 = vmatprep.subr.mxu0 0.0
    %638 = vmatpush1.xpose.msra.mxu0 0.0
    %639 = vmatprep.subr.mxu0 0.0
    %640 = vmatpush1.xpose.msra.mxu0 0.0
    %641 = vmatprep.subr.mxu0 0.0
    %642 = vmatpush1.xpose.msra.mxu0 0.0
    %643 = vmatprep.subr.mxu0 0.0
    %644 = vmatpush1.xpose.msra.mxu0 0.0
    %645 = vmatprep.subr.mxu0 0.0
    %646 = vmatpush1.xpose.msra.mxu0 0.0
    %647 = vmatprep.subr.mxu0 0.0
    %648 = vmatpush1.xpose.msra.mxu0 0.0
    %649 = vmatprep.subr.mxu0 0.0
    %650 = vmatpush1.xpose.msra.mxu0 0.0
    %651 = vmatprep.mubr.f32.mxu0 0.0
    %652 = vmatmul.mubr.f32.gmra.mrb[0].mxu0 %v585
    %v653 = vpop.f32.mrb[0].mxu0
    %v654 = vadd.f32 0.0, %v653
    %v655 = vpop.f32.mrb[0].mxu0
    %656 = vdwg.mxu0
    %v657 = vadd.f32 %v582, %v242
    %v658 = vsub.f32 %v657, %v654
    %v659 = vmax.f32 %v658, 0.0
    %v660 = vrsqrt.pop %v659
    %v661 = vmul.f32 %v659, %v660
    %vm662 = vcmp.eq.f32.partialorder %v659, inf
    %v663 = vsel %vm662, %v659, %v661
    %vm664 = vcmp.eq.f32.partialorder %v659, 0.0
    %v665 = vand.u32 %v659, 2147483648
    %v666 = vsel %vm664, %v665, %v663
    %v667 = vsub.f32 0.0, %v666
    %v668 = vsel %vm255, %v667, -inf
    %v669 = vrot.slane %v668, 4
    %v670 = vmax.f32 %v668, %v669
    %v671 = vrot.slane %v670, 2
    %v672 = vmax.f32 %v670, %v671
    %v673 = vrot.slane %v672, 1
    %v674 = vmax.f32 %v672, %v673
    %v675 = vsub.f32 %v667, %v674
    %v676 = vmul.f32 %v675, 1.442695
    %v677 = vpow.pop %v676
    %v678 = vsel %vm255, %v677, 0.0
    %v679 = vrot.slane %v678, 4
    %v680 = vadd.f32 %v678, %v679
    %v681 = vrot.slane %v680, 2
    %v682 = vadd.f32 %v680, %v681
    %v683 = vrot.slane %v682, 1
    %v684 = vadd.f32 %v682, %v683
    %v685 = vrcp.pop %v684
    %v686 = vmul.f32 %v677, %v685
    %687 = vst.msk [vmem:[#allocation2] sm:$0xff] %vm31, %v367
    %688 = vst.msk [vmem:[#allocation4] sm:$0xff] %vm255, %v686
    // Predicated region
    $region17: #{tpu_custom_call.1} parent=1 // pred_check
      _
    $region18: #{tpu_custom_call.1} parent=1 // pred_check_branch
      %690 = sbr.rel (0) target = $region20
    $region19: #{tpu_custom_call.1} parent=1 // pred_region
      %s692 = ssub.s32 128, 128
      %693 = vsyncadd [#allocation3], %s692
      %s695 = sshll.u32 [#allocation2], 4
      %s696 = int_to_ptr.vmem [resolvable:$true] %s695
      %698 = dma.vmem_to_hbm [thread:$0]  %s696, 128, %s2, [#allocation3]
    $region20: #{tpu_custom_call.1} parent=1 // pred_fallthru
      _
    // Predicated region
    $region21: #{tpu_custom_call.1} parent=1 // pred_check
      _
    $region22: #{tpu_custom_call.1} parent=1 // pred_check_branch
      %700 = sbr.rel (0) target = $region24
    $region23: #{tpu_custom_call.1} parent=1 // pred_region
      %s702 = ssub.s32 128, 128
      %703 = vsyncadd [#allocation5], %s702
      %s705 = sshll.u32 [#allocation4], 4
      %s706 = int_to_ptr.vmem [resolvable:$true] %s705
      %708 = dma.vmem_to_hbm [thread:$0]  %s706, 128, %s3, [#allocation5]
    $region24: #{tpu_custom_call.1} parent=1 // pred_fallthru
      _
    // Predicated region
    $region25: #{tpu_custom_call.1} parent=1 // pred_check
      _
    $region26: #{tpu_custom_call.1} parent=1 // pred_check_branch
      %710 = sbr.rel (0) target = $region28
    $region27: #{tpu_custom_call.1} parent=1 // pred_region
      %711 = dma.done [#allocation3], 128
    $region28: #{tpu_custom_call.1} parent=1 // pred_fallthru
      _
    // Predicated region
    $region29: #{tpu_custom_call.1} parent=1 // pred_check
      _
    $region30: #{tpu_custom_call.1} parent=1 // pred_check_branch
      %713 = sbr.rel (0) target = $region32
    $region31: #{tpu_custom_call.1} parent=1 // pred_region
      %714 = dma.done [#allocation5], 128
    $region32: #{tpu_custom_call.1} parent=1 // pred_fallthru
      _
    %715 = vsyncpa [#allocation3], 1
    %716 = vsyncpa [#allocation5], 1

</llo_original>
